<compile_context>
chip_gen: v5e
topology: v5e:2x2
jax: 0.10.0
libtpu: 0.0.40
codegen_flags: <defaults>
</compile_context>

<pallas_src>
import jax
import jax.numpy as jnp
from jax.experimental import pallas as pl
from jax.experimental.pallas import tpu as pltpu


def _rezero_kernel(g_ref, y_ref, o_ref):
    # g lives in SMEM as a (1,) f32 scalar; the broadcast multiply is one VPU
    # op per vreg.  Compute in f32, cast back to the output dtype.
    g = g_ref[0]
    o_ref[...] = (y_ref[...].astype(jnp.float32) * g).astype(o_ref.dtype)


def _sublane_multiple(dtype):
    """Dtype-native sublane packing: 8 for f32, 16 for bf16, 32 for int8/fp8."""
    return max(8, 32 // jnp.dtype(dtype).itemsize)


def _choose_lanes(n):
    """Pick a lane-dense last dim (multiple of 128); pad if nothing divides."""
    for lanes in (2048, 1024, 512, 256, 128):
        if n % lanes == 0:
            return lanes, 0
    lanes = 128
    pad = (-n) % lanes
    return lanes, pad


def _pick_tile_rows(rows, lanes, dtype_bytes, sub):
    """Largest sublane-rounded row tile within an ~8 MiB/tile byte budget."""
    budget = 8 * 1024 * 1024  # 8 MiB/tile -> <= 32 MiB resident with 2x2 buffers
    max_rows = budget // max(1, lanes * dtype_bytes)
    max_rows = max(sub, (max_rows // sub) * sub)
    tile = min(rows, max_rows)
    if tile < rows:
        tile = max(sub, (tile // sub) * sub)
    else:
        # v7x has 2 TensorCores; for mid/large arrays force >= 2 grid steps so
        # the "parallel" axis can be split across cores.
        total_bytes = rows * lanes * dtype_bytes
        if total_bytes >= (4 * 1024 * 1024) and rows >= 2 * sub:
            half = (rows + 1) // 2
            tile = max(sub, ((half + sub - 1) // sub) * sub)
    return tile


def pallas_rezero(y, g, *, donate=False):
    """Compute y * g on TPU, with g a traced scalar (learnable Rezero gate)."""
    orig_shape = y.shape
    n = int(y.size)
    if n == 0:
        return (y.astype(jnp.float32) * jnp.asarray(g, jnp.float32)).astype(y.dtype)

    dtype_bytes = jnp.dtype(y.dtype).itemsize
    sub = _sublane_multiple(y.dtype)
    lanes, pad = _choose_lanes(n)

    yf = y.reshape(-1)
    if pad:
        yf = jnp.pad(yf, (0, pad))
    rows = (n + pad) // lanes
    y2d = yf.reshape(rows, lanes)
    g1 = jnp.asarray(g, dtype=jnp.float32).reshape((1,))

    tile_rows = _pick_tile_rows(rows, lanes, dtype_bytes, sub)
    grid = (pl.cdiv(rows, tile_rows),)

    extra = {}
    if donate:
        # Only beneficial when the caller actually donates y's buffer;
        # otherwise XLA would insert a defensive copy (extra HBM pass).
        extra["input_output_aliases"] = {1: 0}

    out2d = pl.pallas_call(
        _rezero_kernel,
        out_shape=jax.ShapeDtypeStruct((rows, lanes), y.dtype),
        grid_spec=pltpu.PrefetchScalarGridSpec(
            num_scalar_prefetch=0,
            grid=grid,
            in_specs=[
                pl.BlockSpec(memory_space=pltpu.MemorySpace.SMEM),   # g scalar
                pl.BlockSpec((tile_rows, lanes), lambda i: (i, 0)),  # y row tile
            ],
            out_specs=pl.BlockSpec((tile_rows, lanes), lambda i: (i, 0)),
        ),
        compiler_params=pltpu.CompilerParams(
            dimension_semantics=("parallel",),
            vmem_limit_bytes=48 * 1024 * 1024,
        ),
        cost_estimate=pl.CostEstimate(
            flops=n, transcendentals=0, bytes_accessed=2 * n * dtype_bytes
        ),
        **extra,
    )(g1, y2d)

    out = out2d.reshape(-1)
    if pad:
        out = out[:n]
    return out.reshape(orig_shape)


class Rezero:
    """JAX/Pallas port of the PyTorch Rezero module.

    g is a learnable scalar initialized to zero (like nn.Parameter(zeros(1)));
    it is passed to the kernel as a runtime SMEM scalar, so updating it does
    not trigger a recompile.  With use_pallas=False the scale is a plain jnp
    multiply that XLA can fuse into fn's output epilogue (cheapest option when
    a standalone pass over y is not required).
    """

    def __init__(self, fn, g=None, use_pallas=True):
        self.fn = fn
        self.use_pallas = use_pallas
        self.g = (jnp.zeros((1,), dtype=jnp.float32) if g is None
                  else jnp.asarray(g, jnp.float32).reshape((1,)))

    def __call__(self, x, **kwargs):
        out = self.fn(x, **kwargs)
        y, *rest = out
        if self.use_pallas:
            return (pallas_rezero(y, self.g), *rest)
        # Fusable fast path: XLA folds the scale into the producer.
        return ((y.astype(jnp.float32) * self.g[0]).astype(y.dtype), *rest)


def make_example_fn(key, hidden):
    """Deterministic stand-in for the wrapped `fn` (e.g. an attention block).

    Returns (transformed_x, aux) so the `*rest` pass-through is exercised.
    """
    w = jax.random.normal(key, (hidden, hidden), dtype=jnp.float32) * 0.02

    def fn(x, **kwargs):
        y = jnp.einsum("bsd,de->bse", x, w)
        aux = jnp.sum(x, axis=-1)  # auxiliary output, returned untouched
        return (y, aux)

    return fn


if __name__ == "__main__":
    key = jax.random.PRNGKey(0)
    k_x, k_w, k_z = jax.random.split(key, 3)

    B, S, D = 2, 8, 32
    x = jax.random.normal(k_x, (B, S, D), dtype=jnp.float32)

    fn = make_example_fn(k_w, D)
    y_ref, aux_ref = fn(x)

    module = Rezero(fn)

    # Fresh Rezero: g == 0 -> scaled branch is exactly zero, aux passes through.
    y0, aux0 = module(x)
    jax.block_until_ready((y0, aux0))
    assert jnp.allclose(y0, jnp.zeros_like(y_ref))
    assert jnp.allclose(aux0, aux_ref)

    # "Trained" g: nonzero scale, same compiled kernel (g is a runtime scalar).
    g_trained = 0.37
    module.g = jnp.asarray([g_trained], dtype=jnp.float32)
    y1, aux1 = module(x)
    jax.block_until_ready((y1, aux1))
    assert jnp.allclose(y1, y_ref * g_trained, atol=1e-5, rtol=1e-5)
    assert jnp.allclose(aux1, aux_ref)

    # Non-lane-dense element count + bf16 exercises the pad-to-128 path and
    # dtype-aware sublane rounding.
    z = jax.random.normal(k_z, (3, 5, 7), dtype=jnp.bfloat16)
    z_out = pallas_rezero(z, jnp.float32(0.5))
    jax.block_until_ready(z_out)
    z_exp = (z.astype(jnp.float32) * 0.5).astype(jnp.bfloat16).astype(jnp.float32)
    assert jnp.allclose(z_out.astype(jnp.float32), z_exp, atol=2e-2, rtol=2e-2)

    print("KERNEL_OK")
</pallas_src>

<mosaic_0001>
module attributes {stable_mosaic.version = 11 : i64} {
  func.func @_rezero_kernel(%arg0: i32, %arg1: memref<1xf32, #tpu.memory_space<smem>>, %arg2: memref<1x512xf32, #tpu.memory_space<vmem>>, %arg3: memref<1x512xf32, #tpu.memory_space<vmem>>) attributes {dimension_semantics = [#tpu.dimension_semantics<parallel>], iteration_bounds = array<i64: 1>, scalar_prefetch = 0 : i64, scratch_operands = 0 : i64, tpu.core_type = #tpu.core_type<tc>, window_params = [{transform_indices = @transform_0, window_bounds = array<i64: 1>}, {transform_indices = @transform_1, window_bounds = array<i64: 1, 512>}, {transform_indices = @transform_2, window_bounds = array<i64: 1, 512>}]} {
    %c0 = arith.constant 0 : index
    %0 = memref.load %arg1[%c0] : memref<1xf32, #tpu.memory_space<smem>>
    %c0_0 = arith.constant 0 : index
    %c0_1 = arith.constant 0 : index
    %1 = vector.load %arg2[%c0_0, %c0_1] : memref<1x512xf32, #tpu.memory_space<vmem>>, vector<1x512xf32>
    %2 = vector.broadcast %0 : f32 to vector<1x512xf32>
    %3 = arith.mulf %1, %2 : vector<1x512xf32>
    %c0_2 = arith.constant 0 : index
    %c0_3 = arith.constant 0 : index
    %4 = vector.load %arg3[%c0_2, %c0_3] : memref<1x512xf32, #tpu.memory_space<vmem>>, vector<1x512xf32>
    tpu.vector_store %arg3[%c0_2, %c0_3], %3 {strides = array<i32>} : memref<1x512xf32, #tpu.memory_space<vmem>>, vector<1x512xf32>,
    return
  }
  func.func @transform_0(%arg0: i32) -> i32 {
    %c0_i32 = arith.constant 0 : i32
    %c0_i32_0 = arith.constant 0 : i32
    return %c0_i32 : i32
  }
  func.func @transform_1(%arg0: i32) -> (i32, i32) {
    %c0_i32 = arith.constant 0 : i32
    %c0_i32_0 = arith.constant 0 : i32
    return %arg0, %c0_i32 : i32, i32
  }
  func.func @transform_2(%arg0: i32) -> (i32, i32) {
    %c0_i32 = arith.constant 0 : i32
    %c0_i32_0 = arith.constant 0 : i32
    return %arg0, %c0_i32 : i32, i32
  }
}

</mosaic_0001>

<llo_original>
// kernel: tpu_custom_call.1
$region0: #{tpu_custom_call.1}
  #allocation0 [shape = 'u32[]', space=smem, size = 0x4, offset = 0x4, fixed_abs, tag = 'smem constant byte address 0x4 - core index']
  #allocation1 [shape = 'u32[72,128]{1,0:T(1,128)}', space=vmem, size = 0x9000, scoped, tag = 'internal scratch']
  #allocation2 [shape = 'f32[1]{0:T(128)S(6)}', space=smem, size = 0x200, scoped, tag = 'scoped memory for tpu_custom_call.1']
  %s0 = inlined_call_operand.<no memory space> [shape: f32[1], index: 0, kind: input, shape index: {}]
  %s1 = inlined_call_operand.hbm [shape: f32[1,512], index: 1, kind: input, shape index: {}]
  %s2 = inlined_call_operand.hbm [shape: f32[1,512], index: 2, kind: output, shape index: {}]
  %s3 = sld [smem:[#allocation0]]
  $region22: #{tpu_custom_call.1} parent=0
    _
  %s5 = ssub.s32 1, %s3
  %s6 = scalar_select 0, %s5, %s3
  %7 = sst [smem:[#allocation2]] %s0
  $region1: #{tpu_custom_call.1} parent=0
    #allocation3 [shape = 'u8[2048]{0}', space=vmem, size = 0x800, scoped, tag = 'input window, operand 1, single buffered']
    #allocation4 [shape = 's32[1]{0}', space=sflag, size = 0x4, scoped, tag = 'scoped memory for tpu_custom_call.1']
    #allocation5 [shape = 's32[1]{0}', space=sflag, size = 0x4, scoped, tag = 'scoped memory for tpu_custom_call.1']
    #allocation6 [shape = 'u8[2048]{0}', space=vmem, size = 0x800, scoped, tag = 'output window, operand 0, single buffered']
    %8 = vsyncpa [#allocation4], 0
    %9 = vsyncpa [#allocation5], 0
    // Predicated region
    $region2: #{tpu_custom_call.1} parent=1 // pred_check
      _
    $region3: #{tpu_custom_call.1} parent=1 // pred_check_branch
      %11 = sbr.rel (0) target = $region5
    $region4: #{tpu_custom_call.1} parent=1 // pred_region
      _
    $region5: #{tpu_custom_call.1} parent=1 // pred_fallthru
      _
    // Predicated region
    $region6: #{tpu_custom_call.1} parent=1 // pred_check
      _
    $region7: #{tpu_custom_call.1} parent=1 // pred_check_branch
      %13 = sbr.rel (0) target = $region9
    $region8: #{tpu_custom_call.1} parent=1 // pred_region
      %15 = vsyncadd [#allocation4], 0
      %s17 = sshll.u32 %s1, 4
      %s18 = int_to_ptr.hbm [resolvable:$true] %s17
      %s19 = sshll.u32 [#allocation3], 4
      %s20 = int_to_ptr.vmem [resolvable:$true] %s19
      %22 = dma.hbm_to_vmem [thread:$0]  %s18, 64, %s20, [#allocation4]
    $region9: #{tpu_custom_call.1} parent=1 // pred_fallthru
      _
    // Predicated region
    $region10: #{tpu_custom_call.1} parent=1 // pred_check
      _
    $region11: #{tpu_custom_call.1} parent=1 // pred_check_branch
      %24 = sbr.rel (0) target = $region13
    $region12: #{tpu_custom_call.1} parent=1 // pred_region
      %26 = dma.done [#allocation4], 64
    $region13: #{tpu_custom_call.1} parent=1 // pred_fallthru
      _
    %s27 = sld [smem:[#allocation2]]
    %v28 = vld [vmem:[#allocation3] sm:$0xf]
    %v29 = vstv %s27
    %v30 = vmul.f32 %v28, %v29
    %v31 = vlaneseq
    %vm32 = vcmp.ge.s32.totalorder %v31, 0
    %vm33 = vcmp.lt.s32.totalorder %v31, 512
    %vm34 = vmand %vm32, %vm33
    %35 = vst.msk [vmem:[#allocation6] sm:$0xf] %vm34, %v30
    // Predicated region
    $region14: #{tpu_custom_call.1} parent=1 // pred_check
      _
    $region15: #{tpu_custom_call.1} parent=1 // pred_check_branch
      %37 = sbr.rel (0) target = $region17
    $region16: #{tpu_custom_call.1} parent=1 // pred_region
      %39 = vsyncadd [#allocation5], 0
      %s41 = sshll.u32 [#allocation6], 4
      %s42 = int_to_ptr.vmem [resolvable:$true] %s41
      %s43 = sshll.u32 %s2, 4
      %s44 = int_to_ptr.hbm [resolvable:$true] %s43
      %46 = dma.vmem_to_hbm [thread:$0]  %s42, 64, %s44, [#allocation5]
    $region17: #{tpu_custom_call.1} parent=1 // pred_fallthru
      _
    // Predicated region
    $region18: #{tpu_custom_call.1} parent=1 // pred_check
      _
    $region19: #{tpu_custom_call.1} parent=1 // pred_check_branch
      %48 = sbr.rel (0) target = $region21
    $region20: #{tpu_custom_call.1} parent=1 // pred_region
      %50 = dma.done [#allocation5], 64
    $region21: #{tpu_custom_call.1} parent=1 // pred_fallthru
      _
    %51 = vsyncpa [#allocation4], 1
    %52 = vsyncpa [#allocation5], 1

</llo_original>
